<compile_context>
chip_gen: v5e
topology: v5e:2x2
jax: 0.10.0
libtpu: 0.0.40
codegen_flags: <defaults>
</compile_context>

<pallas_src>
import functools

import jax
import jax.numpy as jnp
from jax.experimental import pallas as pl
from jax.experimental.pallas import tpu as pltpu


def _logit_clip_kernel(x_ref, o_ref, *, clip_c):
    # tanh -> EUP (separate VLIW slot), scalar multiply -> VPU, all in VMEM.
    o_ref[...] = jnp.tanh(x_ref[...]) * clip_c


def _sublane_multiple(dtype):
    return {4: 8, 2: 16, 1: 32}.get(jnp.dtype(dtype).itemsize, 8)


def _round_up(x, m):
    return ((x + m - 1) // m) * m


def _block_target_bytes():
    # Per-block DMA size; in+out double-buffered => ~4x this in scoped VMEM.
    #   v6e / v7x : 4 MiB block -> 16 MiB of buffers (32 MiB default scoped).
    #   v5e / other / unknown : 2 MiB block -> 8 MiB (16 MiB default scoped).
    try:
        kind = jax.devices()[0].device_kind.lower()
    except Exception:
        kind = ""
    if "v6" in kind or "v7" in kind:
        return 4 << 20
    return 2 << 20


def _pick_lane(total):
    # Zero-copy fast path: largest lane width (multiple of 128) dividing the
    # flat size. Otherwise fall back to lane=1024 with minimal tail padding.
    for lane in (1024, 512, 256, 128):
        if total % lane == 0:
            return lane, False
    return 1024, True


def logit_clip(x, clip_c):
    """Applies tanh(x) * C elementwise via a lane-dense tiled Pallas TPU kernel."""
    orig_shape = x.shape
    dtype = x.dtype
    total = x.size
    if total == 0:
        return x

    itemsize = jnp.dtype(dtype).itemsize
    sub = _sublane_multiple(dtype)
    lane, needs_pad = _pick_lane(total)

    flat = x.reshape(-1)  # contiguous reshape: no data movement
    if needs_pad:
        # Pad only to the lane multiple (<= lane-1 elements). The ragged last
        # grid block is masked by Pallas, so we never round rows up to a block.
        padded_total = _round_up(total, lane)
        flat = jnp.pad(flat, (0, padded_total - total))
    else:
        padded_total = total
    rows = padded_total // lane
    x2d = flat.reshape(rows, lane)

    # Block sizing: ~2-4 MiB per block (per generation), rows rounded to the
    # dtype sublane multiple, and split into >= 2 blocks when possible so the
    # "parallel" grid axis can shard across v7x's two TensorCores.
    if rows <= sub:
        tm = rows  # full-dim block for tiny inputs (satisfies layout rule)
    else:
        target_rows = max(sub, _block_target_bytes() // (lane * itemsize))
        tm = min(target_rows, _round_up(pl.cdiv(rows, 2), sub))
        tm = max(tm, sub)
    grid = (pl.cdiv(rows, tm),)

    kernel = functools.partial(_logit_clip_kernel, clip_c=float(clip_c))

    out2d = pl.pallas_call(
        kernel,
        out_shape=jax.ShapeDtypeStruct((rows, lane), dtype),
        grid_spec=pltpu.PrefetchScalarGridSpec(
            num_scalar_prefetch=0,
            grid=grid,
            in_specs=[pl.BlockSpec((tm, lane), lambda i: (i, 0))],
            out_specs=pl.BlockSpec((tm, lane), lambda i: (i, 0)),
        ),
        compiler_params=pltpu.CompilerParams(
            # Parallel axis lets v7x shard grid steps across its 2 TensorCores.
            dimension_semantics=("parallel",),
        ),
        cost_estimate=pl.CostEstimate(
            flops=total,
            transcendentals=total,
            bytes_accessed=2 * total * itemsize,
        ),
    )(x2d)

    if needs_pad:
        return out2d.reshape(-1)[:total].reshape(orig_shape)
    return out2d.reshape(orig_shape)


if __name__ == "__main__":
    key = jax.random.PRNGKey(0)
    C = 2.5  # module hyperparameter (self.C)

    # Small NCHW activation consistent with the module's usage.
    x = jax.random.normal(key, (2, 4, 16, 16), dtype=jnp.float32) * 3.0
    out = jax.block_until_ready(logit_clip(x, C))
    ref = jnp.tanh(x) * C
    assert out.shape == x.shape and out.dtype == x.dtype
    assert jnp.allclose(out, ref, atol=1e-5, rtol=1e-5)

    # Divisible shape large enough to exercise the multi-block zero-copy path.
    x1 = jax.random.normal(jax.random.PRNGKey(2), (2, 4, 64, 64), dtype=jnp.float32)
    out1 = jax.block_until_ready(logit_clip(x1, C))
    assert jnp.allclose(out1, jnp.tanh(x1) * C, atol=1e-5, rtol=1e-5)

    # Non-divisible shape to exercise the minimal-padding ragged-block path.
    x2 = jax.random.normal(jax.random.PRNGKey(1), (3, 5, 33, 47), dtype=jnp.float32)
    out2 = jax.block_until_ready(logit_clip(x2, C))
    assert jnp.allclose(out2, jnp.tanh(x2) * C, atol=1e-5, rtol=1e-5)

    print("KERNEL_OK")
</pallas_src>

<mosaic_0001>
module attributes {stable_mosaic.version = 11 : i64} {
  func.func @_logit_clip_kernel(%arg0: i32, %arg1: memref<2x1024xf32, #tpu.memory_space<vmem>>, %arg2: memref<2x1024xf32, #tpu.memory_space<vmem>>) attributes {dimension_semantics = [#tpu.dimension_semantics<parallel>], iteration_bounds = array<i64: 1>, scalar_prefetch = 0 : i64, scratch_operands = 0 : i64, tpu.core_type = #tpu.core_type<tc>, window_params = [{transform_indices = @transform_0, window_bounds = array<i64: 2, 1024>}, {transform_indices = @transform_1, window_bounds = array<i64: 2, 1024>}]} {
    %c0 = arith.constant 0 : index
    %c0_0 = arith.constant 0 : index
    %0 = vector.load %arg1[%c0, %c0_0] : memref<2x1024xf32, #tpu.memory_space<vmem>>, vector<2x1024xf32>
    %1 = math.tanh %0 : vector<2x1024xf32>
    %cst = arith.constant 2.500000e+00 : f32
    %2 = vector.broadcast %cst : f32 to vector<2x1024xf32>
    %3 = arith.mulf %1, %2 : vector<2x1024xf32>
    %c0_1 = arith.constant 0 : index
    %c0_2 = arith.constant 0 : index
    %4 = vector.load %arg2[%c0_1, %c0_2] : memref<2x1024xf32, #tpu.memory_space<vmem>>, vector<2x1024xf32>
    tpu.vector_store %arg2[%c0_1, %c0_2], %3 {strides = array<i32>} : memref<2x1024xf32, #tpu.memory_space<vmem>>, vector<2x1024xf32>,
    return
  }
  func.func @transform_0(%arg0: i32) -> (i32, i32) {
    %c0_i32 = arith.constant 0 : i32
    %c0_i32_0 = arith.constant 0 : i32
    return %arg0, %c0_i32 : i32, i32
  }
  func.func @transform_1(%arg0: i32) -> (i32, i32) {
    %c0_i32 = arith.constant 0 : i32
    %c0_i32_0 = arith.constant 0 : i32
    return %arg0, %c0_i32 : i32, i32
  }
}

</mosaic_0001>

<llo_original>
// kernel: tpu_custom_call.1
$region0: #{tpu_custom_call.1}
  #allocation0 [shape = 'u32[]', space=smem, size = 0x4, offset = 0x4, fixed_abs, tag = 'smem constant byte address 0x4 - core index']
  #allocation1 [shape = 'u32[72,128]{1,0:T(1,128)}', space=vmem, size = 0x9000, scoped, tag = 'internal scratch']
  %s0 = inlined_call_operand.hbm [shape: f32[2,1024], index: 0, kind: input, shape index: {}]
  %s1 = inlined_call_operand.hbm [shape: f32[2,1024], index: 1, kind: output, shape index: {}]
  %s2 = sld [smem:[#allocation0]]
  $region18: #{tpu_custom_call.1} parent=0
    _
  %s4 = ssub.s32 1, %s2
  %s5 = scalar_select 0, %s4, %s2
  $region1: #{tpu_custom_call.1} parent=0
    #allocation2 [shape = 'u8[8192]{0}', space=vmem, size = 0x2000, scoped, tag = 'input window, operand 0, single buffered']
    #allocation3 [shape = 's32[1]{0}', space=sflag, size = 0x4, scoped, tag = 'scoped memory for tpu_custom_call.1']
    #allocation4 [shape = 's32[1]{0}', space=sflag, size = 0x4, scoped, tag = 'scoped memory for tpu_custom_call.1']
    #allocation5 [shape = 'u8[8192]{0}', space=vmem, size = 0x2000, scoped, tag = 'output window, operand 0, single buffered']
    %6 = vsyncpa [#allocation3], 0
    %7 = vsyncpa [#allocation4], 0
    // Predicated region
    $region2: #{tpu_custom_call.1} parent=1 // pred_check
      _
    $region3: #{tpu_custom_call.1} parent=1 // pred_check_branch
      %9 = sbr.rel (0) target = $region5
    $region4: #{tpu_custom_call.1} parent=1 // pred_region
      %11 = vsyncadd [#allocation3], 0
      %s13 = sshll.u32 %s0, 4
      %s14 = int_to_ptr.hbm [resolvable:$true] %s13
      %s15 = sshll.u32 [#allocation2], 4
      %s16 = int_to_ptr.vmem [resolvable:$true] %s15
      %18 = dma.hbm_to_vmem [thread:$0]  %s14, 256, %s16, [#allocation3]
    $region5: #{tpu_custom_call.1} parent=1 // pred_fallthru
      _
    // Predicated region
    $region6: #{tpu_custom_call.1} parent=1 // pred_check
      _
    $region7: #{tpu_custom_call.1} parent=1 // pred_check_branch
      %20 = sbr.rel (0) target = $region9
    $region8: #{tpu_custom_call.1} parent=1 // pred_region
      %22 = dma.done [#allocation3], 256
    $region9: #{tpu_custom_call.1} parent=1 // pred_fallthru
      _
    %v23 = vld [vmem:[#allocation2] sm:$0xff]
    %v24 = vld [vmem:[#allocation2 + $0x8] sm:$0xff]
    %v25 = vtanh.pop %v23
    %v26 = vtanh.pop %v24
    %v27 = vmul.f32 %v25, 2.5
    %v28 = vmul.f32 %v26, 2.5
    %29 = vst [vmem:[#allocation5] sm:$0xff] %v27
    %30 = vst [vmem:[#allocation5 + $0x8] sm:$0xff] %v28
    // Predicated region
    $region10: #{tpu_custom_call.1} parent=1 // pred_check
      _
    $region11: #{tpu_custom_call.1} parent=1 // pred_check_branch
      %32 = sbr.rel (0) target = $region13
    $region12: #{tpu_custom_call.1} parent=1 // pred_region
      %34 = vsyncadd [#allocation4], 0
      %s36 = sshll.u32 [#allocation5], 4
      %s37 = int_to_ptr.vmem [resolvable:$true] %s36
      %s38 = sshll.u32 %s1, 4
      %s39 = int_to_ptr.hbm [resolvable:$true] %s38
      %41 = dma.vmem_to_hbm [thread:$0]  %s37, 256, %s39, [#allocation4]
    $region13: #{tpu_custom_call.1} parent=1 // pred_fallthru
      _
    // Predicated region
    $region14: #{tpu_custom_call.1} parent=1 // pred_check
      _
    $region15: #{tpu_custom_call.1} parent=1 // pred_check_branch
      %43 = sbr.rel (0) target = $region17
    $region16: #{tpu_custom_call.1} parent=1 // pred_region
      %45 = dma.done [#allocation4], 256
    $region17: #{tpu_custom_call.1} parent=1 // pred_fallthru
      _
    %46 = vsyncpa [#allocation3], 1
    %47 = vsyncpa [#allocation4], 1

</llo_original>
